<compile_context>
chip_gen: v7x
topology: tpu7x:2x2x1
jax: 0.10.0
libtpu: 0.0.40
codegen_flags: <defaults>
</compile_context>

<pallas_src>
import jax
import jax.numpy as jnp
from jax import lax
from jax.experimental import pallas as pl
from jax.experimental.pallas import tpu as pltpu


def nn_kernel(x_ref, w_ref, b_ref, o_ref):
    # x_ref : (1, K)   flattened input, native dtype (cast in-kernel)
    # w_ref : (N, K)   linear weight, native PyTorch layout (K on lanes)
    # b_ref : (1, N)   bias, lane-dense
    # o_ref : (1, N)   sigmoid(x @ W^T + b)
    x = x_ref[...].astype(jnp.float32)                        # (1, K)
    w = w_ref[...].astype(jnp.float32)                        # (N, K)
    # MXU matmul contracting K of both operands -> (1, N); f32 accumulation.
    y = lax.dot_general(
        x, w,
        dimension_numbers=(((1,), (1,)), ((), ())),
        preferred_element_type=jnp.float32,
    )
    y = y + b_ref[...].astype(jnp.float32)                    # (1, N)
    o_ref[...] = jax.nn.sigmoid(y)                            # EUP exp


def nn_forward(x, w, b):
    """x: any shape with prod(shape) == K; w: (N, K); b: (N,). Returns (N,) f32."""
    N, K = w.shape
    total = 1
    for d in x.shape:
        total *= int(d)
    assert total == K, (
        f"prod(x.shape)={total} must equal input_size={K} (torch x.view(-1))"
    )

    x_flat = x.reshape(1, K)        # torch: x.float().view(-1); cast is in-kernel
    b_row = b.reshape(1, N)         # lane-dense bias

    cost = pl.CostEstimate(
        flops=2 * N * K,
        transcendentals=N,
        bytes_accessed=(N * K + K + 2 * N) * 4,
    )

    out = pl.pallas_call(
        nn_kernel,
        out_shape=jax.ShapeDtypeStruct((1, N), jnp.float32),
        in_specs=[
            pl.BlockSpec(memory_space=pltpu.MemorySpace.VMEM),   # x (1, K)
            pl.BlockSpec(memory_space=pltpu.MemorySpace.VMEM),   # W (N, K)
            pl.BlockSpec(memory_space=pltpu.MemorySpace.VMEM),   # b (1, N)
        ],
        out_specs=pl.BlockSpec(memory_space=pltpu.MemorySpace.VMEM),
        cost_estimate=cost,
    )(x_flat, w, b_row)
    return out.reshape(N)


if __name__ == "__main__":
    # Small shapes consistent with the module: the forward flattens the whole
    # input, so input_size = prod(x.shape).
    x_shape = (2, 4, 16, 16)            # 2*4*16*16 = 2048 elements
    input_size = 2 * 4 * 16 * 16        # 2048
    num_classes = 10

    key = jax.random.PRNGKey(0)
    kx, kw, kb = jax.random.split(key, 3)

    x = jax.random.normal(kx, x_shape, dtype=jnp.float32)
    # Deterministic init mimicking nn.Linear's uniform(-1/sqrt(K), 1/sqrt(K))
    bound = 1.0 / jnp.sqrt(jnp.float32(input_size))
    w = jax.random.uniform(kw, (num_classes, input_size),
                           minval=-bound, maxval=bound, dtype=jnp.float32)
    b = jax.random.uniform(kb, (num_classes,),
                           minval=-bound, maxval=bound, dtype=jnp.float32)

    out = nn_forward(x, w, b)
    jax.block_until_ready(out)

    # Cross-check against plain-JAX reference (same semantics as the torch module)
    ref = jax.nn.sigmoid(w @ x.astype(jnp.float32).reshape(-1) + b)
    assert out.shape == (num_classes,)
    assert jnp.allclose(out, ref, atol=1e-5, rtol=1e-5)

    print("KERNEL_OK")
</pallas_src>

<mosaic_0001>
module attributes {stable_mosaic.version = 11 : i64} {
  func.func @nn_kernel(%arg0: memref<1x2048xf32, #tpu.memory_space<vmem>>, %arg1: memref<10x2048xf32, #tpu.memory_space<vmem>>, %arg2: memref<1x10xf32, #tpu.memory_space<vmem>>, %arg3: memref<1x10xf32, #tpu.memory_space<vmem>>) attributes {dimension_semantics = [], scalar_prefetch = 0 : i64, scratch_operands = 0 : i64, tpu.core_type = #tpu.core_type<tc>} {
    %c0 = arith.constant 0 : index
    %c0_0 = arith.constant 0 : index
    %0 = vector.load %arg0[%c0, %c0_0] : memref<1x2048xf32, #tpu.memory_space<vmem>>, vector<1x2048xf32>
    %c0_1 = arith.constant 0 : index
    %c0_2 = arith.constant 0 : index
    %1 = vector.load %arg1[%c0_1, %c0_2] : memref<10x2048xf32, #tpu.memory_space<vmem>>, vector<10x2048xf32>
    %cst = arith.constant dense<0.000000e+00> : vector<1x10xf32>
    %2 = tpu.matmul %0, %1, %cst {dimension_numbers = #tpu.dot_dimension_numbers<[1], [1], [0], [0], [0, 0, 1, 0], [], []>} : vector<1x2048xf32>, vector<10x2048xf32>, vector<1x10xf32> -> vector<1x10xf32>
    %c0_3 = arith.constant 0 : index
    %c0_4 = arith.constant 0 : index
    %3 = vector.load %arg2[%c0_3, %c0_4] : memref<1x10xf32, #tpu.memory_space<vmem>>, vector<1x10xf32>
    %4 = arith.addf %2, %3 : vector<1x10xf32>
    %5 = arith.negf %4 : vector<1x10xf32>
    %6 = math.exp %5 : vector<1x10xf32>
    %cst_5 = arith.constant 1.000000e+00 : f32
    %7 = vector.broadcast %cst_5 : f32 to vector<1x10xf32>
    %8 = arith.addf %7, %6 : vector<1x10xf32>
    %9 = arith.divf %7, %8 : vector<1x10xf32>
    %c0_6 = arith.constant 0 : index
    %c0_7 = arith.constant 0 : index
    %10 = vector.load %arg3[%c0_6, %c0_7] : memref<1x10xf32, #tpu.memory_space<vmem>>, vector<1x10xf32>
    tpu.vector_store %arg3[%c0_6, %c0_7], %9 {strides = array<i32>} : memref<1x10xf32, #tpu.memory_space<vmem>>, vector<1x10xf32>,
    return
  }
}

</mosaic_0001>

<llo_original>
// kernel: tpu_custom_call.1
$region0: #{tpu_custom_call.1}
  #allocation0 [shape = 'u32[]', space=smem, size = 0x4, offset = 0x4, fixed_abs, tag = 'smem constant byte address 0x4 - core index']
  #allocation1 [shape = 'u32[144,128]{1,0:T(1,128)}', space=vmem, size = 0x12000, scoped, tag = 'internal scratch']
  %s0 = inlined_call_operand.hbm [shape: f32[1,2048], index: 0, kind: input, shape index: {}]
  %s1 = inlined_call_operand.hbm [shape: f32[10,2048], index: 1, kind: input, shape index: {}]
  %s2 = inlined_call_operand.vmem [shape: f32[1,10], index: 2, kind: input, shape index: {}]
  %s3 = inlined_call_operand.hbm [shape: f32[1,10], index: 3, kind: output, shape index: {}]
  %s4 = sld [smem:[#allocation0]]
  $region30: #{tpu_custom_call.1} parent=0
    _
  %s6 = ssub.s32 1, %s4
  %s7 = scalar_select 0, %s6, %s4
  $region1: #{tpu_custom_call.1} parent=0
    #allocation2 [shape = 'u8[8192]{0}', space=vmem, size = 0x2000, scoped, tag = 'input window, operand 0, single buffered']
    #allocation3 [shape = 's32[1]{0}', space=sflag, size = 0x4, scoped, tag = 'scoped memory for tpu_custom_call.1']
    #allocation4 [shape = 's32[1]{0}', space=sflag, size = 0x4, scoped, tag = 'scoped memory for tpu_custom_call.1']
    #allocation5 [shape = 'u8[131072]{0}', space=vmem, size = 0x20000, scoped, tag = 'input window, operand 1, single buffered']
    #allocation6 [shape = 's32[1]{0}', space=sflag, size = 0x4, scoped, tag = 'scoped memory for tpu_custom_call.1']
    #allocation7 [shape = 'u8[512]{0}', space=vmem, size = 0x400, scoped, tag = 'output window, operand 0, single buffered']
    %8 = vsyncpa [#allocation3], 0
    %9 = vsyncpa [#allocation6], 0
    %10 = vsyncpa [#allocation4], 0
    // Predicated region
    $region2: #{tpu_custom_call.1} parent=1 // pred_check
      _
    $region3: #{tpu_custom_call.1} parent=1 // pred_check_branch
      %12 = sbr.rel (0) target = $region5
    $region4: #{tpu_custom_call.1} parent=1 // pred_region
      %s14 = ssub.s32 256, 256
      %15 = vsyncadd [#allocation3], %s14
      %s17 = sshll.u32 [#allocation2], 4
      %s18 = int_to_ptr.vmem [resolvable:$true] %s17
      %20 = dma.hbm_to_vmem [thread:$0]  %s0, 256, %s18, [#allocation3]
    $region5: #{tpu_custom_call.1} parent=1 // pred_fallthru
      _
    // Predicated region
    $region6: #{tpu_custom_call.1} parent=1 // pred_check
      _
    $region7: #{tpu_custom_call.1} parent=1 // pred_check_branch
      %22 = sbr.rel (0) target = $region9
    $region8: #{tpu_custom_call.1} parent=1 // pred_region
      %s24 = ssub.s32 4096, 4096
      %25 = vsyncadd [#allocation6], %s24
      %s26 = sshll.u32 [#allocation5], 4
      %s27 = int_to_ptr.vmem [resolvable:$true] %s26
      %32 = dma.hbm_to_vmem [thread:$0]  %s1, 4096, %s27, [#allocation6], 2048, 2048, 128
    $region9: #{tpu_custom_call.1} parent=1 // pred_fallthru
      _
    // Predicated region
    $region10: #{tpu_custom_call.1} parent=1 // pred_check
      _
    $region11: #{tpu_custom_call.1} parent=1 // pred_check_branch
      %34 = sbr.rel (0) target = $region13
    $region12: #{tpu_custom_call.1} parent=1 // pred_region
      _
    $region13: #{tpu_custom_call.1} parent=1 // pred_fallthru
      _
    // Predicated region
    $region14: #{tpu_custom_call.1} parent=1 // pred_check
      _
    $region15: #{tpu_custom_call.1} parent=1 // pred_check_branch
      %36 = sbr.rel (0) target = $region17
    $region16: #{tpu_custom_call.1} parent=1 // pred_region
      %37 = dma.done [#allocation3], 256
    $region17: #{tpu_custom_call.1} parent=1 // pred_fallthru
      _
    // Predicated region
    $region18: #{tpu_custom_call.1} parent=1 // pred_check
      _
    $region19: #{tpu_custom_call.1} parent=1 // pred_check_branch
      %39 = sbr.rel (0) target = $region21
    $region20: #{tpu_custom_call.1} parent=1 // pred_region
      %40 = dma.done [#allocation6], 4096
    $region21: #{tpu_custom_call.1} parent=1 // pred_fallthru
      _
    %v41 = vld [vmem:[#allocation2] sm:$0xff]
    %v42 = vld [vmem:[#allocation2 + $0x8] sm:$0xff]
    %v43 = vld [vmem:[#allocation5] sm:$0xff]
    %v44 = vld [vmem:[#allocation5 + $0x8] sm:$0xff]
    %v45 = vld [vmem:[#allocation5 + $0x10] sm:$0xff]
    %v46 = vld [vmem:[#allocation5 + $0x18] sm:$0xff]
    %v47 = vld [vmem:[#allocation5 + $0x20] sm:$0xff]
    %v48 = vld [vmem:[#allocation5 + $0x28] sm:$0xff]
    %v49 = vld [vmem:[#allocation5 + $0x30] sm:$0xff]
    %v50 = vld [vmem:[#allocation5 + $0x38] sm:$0xff]
    %v51 = vld [vmem:[#allocation5 + $0x40] sm:$0xff]
    %v52 = vld [vmem:[#allocation5 + $0x48] sm:$0xff]
    %v53 = vld [vmem:[#allocation5 + $0x50] sm:$0xff]
    %v54 = vld [vmem:[#allocation5 + $0x58] sm:$0xff]
    %v55 = vld [vmem:[#allocation5 + $0x60] sm:$0xff]
    %v56 = vld [vmem:[#allocation5 + $0x68] sm:$0xff]
    %v57 = vld [vmem:[#allocation5 + $0x70] sm:$0xff]
    %v58 = vld [vmem:[#allocation5 + $0x78] sm:$0xff]
    %v59 = vld [vmem:[#allocation5 + $0x80] sm:$0x3]
    %v60 = vld [vmem:[#allocation5 + $0x88] sm:$0x3]
    %v61 = vld [vmem:[#allocation5 + $0x90] sm:$0x3]
    %v62 = vld [vmem:[#allocation5 + $0x98] sm:$0x3]
    %v63 = vld [vmem:[#allocation5 + $0xa0] sm:$0x3]
    %v64 = vld [vmem:[#allocation5 + $0xa8] sm:$0x3]
    %v65 = vld [vmem:[#allocation5 + $0xb0] sm:$0x3]
    %v66 = vld [vmem:[#allocation5 + $0xb8] sm:$0x3]
    %v67 = vld [vmem:[#allocation5 + $0xc0] sm:$0x3]
    %v68 = vld [vmem:[#allocation5 + $0xc8] sm:$0x3]
    %v69 = vld [vmem:[#allocation5 + $0xd0] sm:$0x3]
    %v70 = vld [vmem:[#allocation5 + $0xd8] sm:$0x3]
    %v71 = vld [vmem:[#allocation5 + $0xe0] sm:$0x3]
    %v72 = vld [vmem:[#allocation5 + $0xe8] sm:$0x3]
    %v73 = vld [vmem:[#allocation5 + $0xf0] sm:$0x3]
    %v74 = vld [vmem:[#allocation5 + $0xf8] sm:$0x3]
    %v75 = vld [vmem:[%s2] sm:$0x1]
    %v78 = vlaneseq
    %v79 = vshrl.u32 %v78, 7
    %v80 = vsub.s32 0, %v79
    %v81 = vrot.slane %v41, %v80
    %v82 = vlaneseq
    %v83 = vshrl.u32 %v82, 7
    %v84 = vsub.s32 1, %v83
    %v85 = vrot.slane %v41, %v84
    %v86 = vlaneseq
    %v87 = vshrl.u32 %v86, 7
    %v88 = vsub.s32 2, %v87
    %v89 = vrot.slane %v41, %v88
    %v90 = vlaneseq
    %v91 = vshrl.u32 %v90, 7
    %v92 = vsub.s32 3, %v91
    %v93 = vrot.slane %v41, %v92
    %v94 = vlaneseq
    %v95 = vshrl.u32 %v94, 7
    %v96 = vsub.s32 4, %v95
    %v97 = vrot.slane %v41, %v96
    %v98 = vlaneseq
    %v99 = vshrl.u32 %v98, 7
    %v100 = vsub.s32 5, %v99
    %v101 = vrot.slane %v41, %v100
    %v102 = vlaneseq
    %v103 = vshrl.u32 %v102, 7
    %v104 = vsub.s32 6, %v103
    %v105 = vrot.slane %v41, %v104
    %v106 = vlaneseq
    %v107 = vshrl.u32 %v106, 7
    %v108 = vsub.s32 7, %v107
    %v109 = vrot.slane %v41, %v108
    %v110 = vlaneseq
    %v111 = vshrl.u32 %v110, 7
    %v112 = vsub.s32 0, %v111
    %v113 = vrot.slane %v42, %v112
    %v114 = vlaneseq
    %v115 = vshrl.u32 %v114, 7
    %v116 = vsub.s32 1, %v115
    %v117 = vrot.slane %v42, %v116
    %v118 = vlaneseq
    %v119 = vshrl.u32 %v118, 7
    %v120 = vsub.s32 2, %v119
    %v121 = vrot.slane %v42, %v120
    %v122 = vlaneseq
    %v123 = vshrl.u32 %v122, 7
    %v124 = vsub.s32 3, %v123
    %v125 = vrot.slane %v42, %v124
    %v126 = vlaneseq
    %v127 = vshrl.u32 %v126, 7
    %v128 = vsub.s32 4, %v127
    %v129 = vrot.slane %v42, %v128
    %v130 = vlaneseq
    %v131 = vshrl.u32 %v130, 7
    %v132 = vsub.s32 5, %v131
    %v133 = vrot.slane %v42, %v132
    %v134 = vlaneseq
    %v135 = vshrl.u32 %v134, 7
    %v136 = vsub.s32 6, %v135
    %v137 = vrot.slane %v42, %v136
    %v138 = vlaneseq
    %v139 = vshrl.u32 %v138, 7
    %v140 = vsub.s32 7, %v139
    %v141 = vrot.slane %v42, %v140
    %158 = vmatprep.subr.mxu0 %v44
    %159 = vmatpush1.xpose.msra.mxu0 %v43
    %160 = vmatprep.subr.mxu0 %v60
    %161 = vmatpush1.xpose.msra.mxu0 %v59
    %162 = vmatprep.subr.mxu0 0.0
    %163 = vmatpush1.xpose.msra.mxu0 0.0
    %164 = vmatprep.subr.mxu0 0.0
    %165 = vmatpush1.xpose.msra.mxu0 0.0
    %166 = vmatprep.subr.mxu0 0.0
    %167 = vmatpush1.xpose.msra.mxu0 0.0
    %168 = vmatprep.subr.mxu0 0.0
    %169 = vmatpush1.xpose.msra.mxu0 0.0
    %170 = vmatprep.subr.mxu0 0.0
    %171 = vmatpush1.xpose.msra.mxu0 0.0
    %172 = vmatprep.subr.mxu0 0.0
    %173 = vmatpush1.xpose.msra.mxu0 0.0
    %174 = vmatprep.subr.mxu0 0.0
    %175 = vmatpush1.xpose.msra.mxu0 0.0
    %176 = vmatprep.subr.mxu0 0.0
    %177 = vmatpush1.xpose.msra.mxu0 0.0
    %178 = vmatprep.subr.mxu0 0.0
    %179 = vmatpush1.xpose.msra.mxu0 0.0
    %180 = vmatprep.subr.mxu0 0.0
    %181 = vmatpush1.xpose.msra.mxu0 0.0
    %182 = vmatprep.subr.mxu0 0.0
    %183 = vmatpush1.xpose.msra.mxu0 0.0
    %184 = vmatprep.subr.mxu0 0.0
    %185 = vmatpush1.xpose.msra.mxu0 0.0
    %186 = vmatprep.subr.mxu0 0.0
    %187 = vmatpush1.xpose.msra.mxu0 0.0
    %188 = vmatprep.subr.mxu0 0.0
    %189 = vmatpush1.xpose.msra.mxu0 0.0
    %190 = vmatprep.subr.mxu0 0.0
    %191 = vmatpush1.xpose.msra.mxu0 0.0
    %192 = vmatprep.subr.mxu0 0.0
    %193 = vmatpush1.xpose.msra.mxu0 0.0
    %194 = vmatprep.subr.mxu0 0.0
    %195 = vmatpush1.xpose.msra.mxu0 0.0
    %196 = vmatprep.subr.mxu0 0.0
    %197 = vmatpush1.xpose.msra.mxu0 0.0
    %198 = vmatprep.subr.mxu0 0.0
    %199 = vmatpush1.xpose.msra.mxu0 0.0
    %200 = vmatprep.subr.mxu0 0.0
    %201 = vmatpush1.xpose.msra.mxu0 0.0
    %202 = vmatprep.subr.mxu0 0.0
    %203 = vmatpush1.xpose.msra.mxu0 0.0
    %204 = vmatprep.subr.mxu0 0.0
    %205 = vmatpush1.xpose.msra.mxu0 0.0
    %206 = vmatprep.subr.mxu0 0.0
    %207 = vmatpush1.xpose.msra.mxu0 0.0
    %208 = vmatprep.subr.mxu0 0.0
    %209 = vmatpush1.xpose.msra.mxu0 0.0
    %210 = vmatprep.subr.mxu0 0.0
    %211 = vmatpush1.xpose.msra.mxu0 0.0
    %212 = vmatprep.subr.mxu0 0.0
    %213 = vmatpush1.xpose.msra.mxu0 0.0
    %214 = vmatprep.subr.mxu0 0.0
    %215 = vmatpush1.xpose.msra.mxu0 0.0
    %216 = vmatprep.subr.mxu0 0.0
    %217 = vmatpush1.xpose.msra.mxu0 0.0
    %218 = vmatprep.subr.mxu0 0.0
    %219 = vmatpush1.xpose.msra.mxu0 0.0
    %220 = vmatprep.subr.mxu0 0.0
    %221 = vmatpush1.xpose.msra.mxu0 0.0
    %222 = vmatprep.mubr.f32.mxu0 %v85
    %223 = vmatmul.mubr.f32.gmra.mrb[0].mxu0 %v81
    %v224 = vpop.f32.mrb[0].mxu0
    %v225 = vadd.f32 %v75, %v224
    %v226 = vpop.f32.mrb[0].mxu0
    %227 = vdwg.mxu0
    %228 = vmatprep.subr.mxu0 %v46
    %229 = vmatpush1.xpose.msra.mxu0 %v45
    %230 = vmatprep.subr.mxu0 %v62
    %231 = vmatpush1.xpose.msra.mxu0 %v61
    %232 = vmatprep.subr.mxu0 0.0
    %233 = vmatpush1.xpose.msra.mxu0 0.0
    %234 = vmatprep.subr.mxu0 0.0
    %235 = vmatpush1.xpose.msra.mxu0 0.0
    %236 = vmatprep.subr.mxu0 0.0
    %237 = vmatpush1.xpose.msra.mxu0 0.0
    %238 = vmatprep.subr.mxu0 0.0
    %239 = vmatpush1.xpose.msra.mxu0 0.0
    %240 = vmatprep.subr.mxu0 0.0
    %241 = vmatpush1.xpose.msra.mxu0 0.0
    %242 = vmatprep.subr.mxu0 0.0
    %243 = vmatpush1.xpose.msra.mxu0 0.0
    %244 = vmatprep.subr.mxu0 0.0
    %245 = vmatpush1.xpose.msra.mxu0 0.0
    %246 = vmatprep.subr.mxu0 0.0
    %247 = vmatpush1.xpose.msra.mxu0 0.0
    %248 = vmatprep.subr.mxu0 0.0
    %249 = vmatpush1.xpose.msra.mxu0 0.0
    %250 = vmatprep.subr.mxu0 0.0
    %251 = vmatpush1.xpose.msra.mxu0 0.0
    %252 = vmatprep.subr.mxu0 0.0
    %253 = vmatpush1.xpose.msra.mxu0 0.0
    %254 = vmatprep.subr.mxu0 0.0
    %255 = vmatpush1.xpose.msra.mxu0 0.0
    %256 = vmatprep.subr.mxu0 0.0
    %257 = vmatpush1.xpose.msra.mxu0 0.0
    %258 = vmatprep.subr.mxu0 0.0
    %259 = vmatpush1.xpose.msra.mxu0 0.0
    %260 = vmatprep.subr.mxu0 0.0
    %261 = vmatpush1.xpose.msra.mxu0 0.0
    %262 = vmatprep.subr.mxu0 0.0
    %263 = vmatpush1.xpose.msra.mxu0 0.0
    %264 = vmatprep.subr.mxu0 0.0
    %265 = vmatpush1.xpose.msra.mxu0 0.0
    %266 = vmatprep.subr.mxu0 0.0
    %267 = vmatpush1.xpose.msra.mxu0 0.0
    %268 = vmatprep.subr.mxu0 0.0
    %269 = vmatpush1.xpose.msra.mxu0 0.0
    %270 = vmatprep.subr.mxu0 0.0
    %271 = vmatpush1.xpose.msra.mxu0 0.0
    %272 = vmatprep.subr.mxu0 0.0
    %273 = vmatpush1.xpose.msra.mxu0 0.0
    %274 = vmatprep.subr.mxu0 0.0
    %275 = vmatpush1.xpose.msra.mxu0 0.0
    %276 = vmatprep.subr.mxu0 0.0
    %277 = vmatpush1.xpose.msra.mxu0 0.0
    %278 = vmatprep.subr.mxu0 0.0
    %279 = vmatpush1.xpose.msra.mxu0 0.0
    %280 = vmatprep.subr.mxu0 0.0
    %281 = vmatpush1.xpose.msra.mxu0 0.0
    %282 = vmatprep.subr.mxu0 0.0
    %283 = vmatpush1.xpose.msra.mxu0 0.0
    %284 = vmatprep.subr.mxu0 0.0
    %285 = vmatpush1.xpose.msra.mxu0 0.0
    %286 = vmatprep.subr.mxu0 0.0
    %287 = vmatpush1.xpose.msra.mxu0 0.0
    %288 = vmatprep.subr.mxu0 0.0
    %289 = vmatpush1.xpose.msra.mxu0 0.0
    %290 = vmatprep.subr.mxu0 0.0
    %291 = vmatpush1.xpose.msra.mxu0 0.0
    %292 = vmatprep.mubr.f32.mxu0 %v93
    %293 = vmatmul.mubr.f32.gmra.mrb[0].mxu0 %v89
    %v294 = vpop.f32.mrb[0].mxu0
    %v295 = vadd.f32 %v225, %v294
    %v296 = vpop.f32.mrb[0].mxu0
    %297 = vdwg.mxu0
    %298 = vmatprep.subr.mxu0 %v48
    %299 = vmatpush1.xpose.msra.mxu0 %v47
    %300 = vmatprep.subr.mxu0 %v64
    %301 = vmatpush1.xpose.msra.mxu0 %v63
    %302 = vmatprep.subr.mxu0 0.0
    %303 = vmatpush1.xpose.msra.mxu0 0.0
    %304 = vmatprep.subr.mxu0 0.0
    %305 = vmatpush1.xpose.msra.mxu0 0.0
    %306 = vmatprep.subr.mxu0 0.0
    %307 = vmatpush1.xpose.msra.mxu0 0.0
    %308 = vmatprep.subr.mxu0 0.0
    %309 = vmatpush1.xpose.msra.mxu0 0.0
    %310 = vmatprep.subr.mxu0 0.0
    %311 = vmatpush1.xpose.msra.mxu0 0.0
    %312 = vmatprep.subr.mxu0 0.0
    %313 = vmatpush1.xpose.msra.mxu0 0.0
    %314 = vmatprep.subr.mxu0 0.0
    %315 = vmatpush1.xpose.msra.mxu0 0.0
    %316 = vmatprep.subr.mxu0 0.0
    %317 = vmatpush1.xpose.msra.mxu0 0.0
    %318 = vmatprep.subr.mxu0 0.0
    %319 = vmatpush1.xpose.msra.mxu0 0.0
    %320 = vmatprep.subr.mxu0 0.0
    %321 = vmatpush1.xpose.msra.mxu0 0.0
    %322 = vmatprep.subr.mxu0 0.0
    %323 = vmatpush1.xpose.msra.mxu0 0.0
    %324 = vmatprep.subr.mxu0 0.0
    %325 = vmatpush1.xpose.msra.mxu0 0.0
    %326 = vmatprep.subr.mxu0 0.0
    %327 = vmatpush1.xpose.msra.mxu0 0.0
    %328 = vmatprep.subr.mxu0 0.0
    %329 = vmatpush1.xpose.msra.mxu0 0.0
    %330 = vmatprep.subr.mxu0 0.0
    %331 = vmatpush1.xpose.msra.mxu0 0.0
    %332 = vmatprep.subr.mxu0 0.0
    %333 = vmatpush1.xpose.msra.mxu0 0.0
    %334 = vmatprep.subr.mxu0 0.0
    %335 = vmatpush1.xpose.msra.mxu0 0.0
    %336 = vmatprep.subr.mxu0 0.0
    %337 = vmatpush1.xpose.msra.mxu0 0.0
    %338 = vmatprep.subr.mxu0 0.0
    %339 = vmatpush1.xpose.msra.mxu0 0.0
    %340 = vmatprep.subr.mxu0 0.0
    %341 = vmatpush1.xpose.msra.mxu0 0.0
    %342 = vmatprep.subr.mxu0 0.0
    %343 = vmatpush1.xpose.msra.mxu0 0.0
    %344 = vmatprep.subr.mxu0 0.0
    %345 = vmatpush1.xpose.msra.mxu0 0.0
    %346 = vmatprep.subr.mxu0 0.0
    %347 = vmatpush1.xpose.msra.mxu0 0.0
    %348 = vmatprep.subr.mxu0 0.0
    %349 = vmatpush1.xpose.msra.mxu0 0.0
    %350 = vmatprep.subr.mxu0 0.0
    %351 = vmatpush1.xpose.msra.mxu0 0.0
    %352 = vmatprep.subr.mxu0 0.0
    %353 = vmatpush1.xpose.msra.mxu0 0.0
    %354 = vmatprep.subr.mxu0 0.0
    %355 = vmatpush1.xpose.msra.mxu0 0.0
    %356 = vmatprep.subr.mxu0 0.0
    %357 = vmatpush1.xpose.msra.mxu0 0.0
    %358 = vmatprep.subr.mxu0 0.0
    %359 = vmatpush1.xpose.msra.mxu0 0.0
    %360 = vmatprep.subr.mxu0 0.0
    %361 = vmatpush1.xpose.msra.mxu0 0.0
    %362 = vmatprep.mubr.f32.mxu0 %v101
    %363 = vmatmul.mubr.f32.gmra.mrb[0].mxu0 %v97
    %v364 = vpop.f32.mrb[0].mxu0
    %v365 = vadd.f32 %v295, %v364
    %v366 = vpop.f32.mrb[0].mxu0
    %367 = vdwg.mxu0
    %368 = vmatprep.subr.mxu0 %v50
    %369 = vmatpush1.xpose.msra.mxu0 %v49
    %370 = vmatprep.subr.mxu0 %v66
    %371 = vmatpush1.xpose.msra.mxu0 %v65
    %372 = vmatprep.subr.mxu0 0.0
    %373 = vmatpush1.xpose.msra.mxu0 0.0
    %374 = vmatprep.subr.mxu0 0.0
    %375 = vmatpush1.xpose.msra.mxu0 0.0
    %376 = vmatprep.subr.mxu0 0.0
    %377 = vmatpush1.xpose.msra.mxu0 0.0
    %378 = vmatprep.subr.mxu0 0.0
    %379 = vmatpush1.xpose.msra.mxu0 0.0
    %380 = vmatprep.subr.mxu0 0.0
    %381 = vmatpush1.xpose.msra.mxu0 0.0
    %382 = vmatprep.subr.mxu0 0.0
    %383 = vmatpush1.xpose.msra.mxu0 0.0
    %384 = vmatprep.subr.mxu0 0.0
    %385 = vmatpush1.xpose.msra.mxu0 0.0
    %386 = vmatprep.subr.mxu0 0.0
    %387 = vmatpush1.xpose.msra.mxu0 0.0
    %388 = vmatprep.subr.mxu0 0.0
    %389 = vmatpush1.xpose.msra.mxu0 0.0
    %390 = vmatprep.subr.mxu0 0.0
    %391 = vmatpush1.xpose.msra.mxu0 0.0
    %392 = vmatprep.subr.mxu0 0.0
    %393 = vmatpush1.xpose.msra.mxu0 0.0
    %394 = vmatprep.subr.mxu0 0.0
    %395 = vmatpush1.xpose.msra.mxu0 0.0
    %396 = vmatprep.subr.mxu0 0.0
    %397 = vmatpush1.xpose.msra.mxu0 0.0
    %398 = vmatprep.subr.mxu0 0.0
    %399 = vmatpush1.xpose.msra.mxu0 0.0
    %400 = vmatprep.subr.mxu0 0.0
    %401 = vmatpush1.xpose.msra.mxu0 0.0
    %402 = vmatprep.subr.mxu0 0.0
    %403 = vmatpush1.xpose.msra.mxu0 0.0
    %404 = vmatprep.subr.mxu0 0.0
    %405 = vmatpush1.xpose.msra.mxu0 0.0
    %406 = vmatprep.subr.mxu0 0.0
    %407 = vmatpush1.xpose.msra.mxu0 0.0
    %408 = vmatprep.subr.mxu0 0.0
    %409 = vmatpush1.xpose.msra.mxu0 0.0
    %410 = vmatprep.subr.mxu0 0.0
    %411 = vmatpush1.xpose.msra.mxu0 0.0
    %412 = vmatprep.subr.mxu0 0.0
    %413 = vmatpush1.xpose.msra.mxu0 0.0
    %414 = vmatprep.subr.mxu0 0.0
    %415 = vmatpush1.xpose.msra.mxu0 0.0
    %416 = vmatprep.subr.mxu0 0.0
    %417 = vmatpush1.xpose.msra.mxu0 0.0
    %418 = vmatprep.subr.mxu0 0.0
    %419 = vmatpush1.xpose.msra.mxu0 0.0
    %420 = vmatprep.subr.mxu0 0.0
    %421 = vmatpush1.xpose.msra.mxu0 0.0
    %422 = vmatprep.subr.mxu0 0.0
    %423 = vmatpush1.xpose.msra.mxu0 0.0
    %424 = vmatprep.subr.mxu0 0.0
    %425 = vmatpush1.xpose.msra.mxu0 0.0
    %426 = vmatprep.subr.mxu0 0.0
    %427 = vmatpush1.xpose.msra.mxu0 0.0
    %428 = vmatprep.subr.mxu0 0.0
    %429 = vmatpush1.xpose.msra.mxu0 0.0
    %430 = vmatprep.subr.mxu0 0.0
    %431 = vmatpush1.xpose.msra.mxu0 0.0
    %432 = vmatprep.mubr.f32.mxu0 %v109
    %433 = vmatmul.mubr.f32.gmra.mrb[0].mxu0 %v105
    %v434 = vpop.f32.mrb[0].mxu0
    %v435 = vadd.f32 %v365, %v434
    %v436 = vpop.f32.mrb[0].mxu0
    %437 = vdwg.mxu0
    %438 = vmatprep.subr.mxu0 %v52
    %439 = vmatpush1.xpose.msra.mxu0 %v51
    %440 = vmatprep.subr.mxu0 %v68
    %441 = vmatpush1.xpose.msra.mxu0 %v67
    %442 = vmatprep.subr.mxu0 0.0
    %443 = vmatpush1.xpose.msra.mxu0 0.0
    %444 = vmatprep.subr.mxu0 0.0
    %445 = vmatpush1.xpose.msra.mxu0 0.0
    %446 = vmatprep.subr.mxu0 0.0
    %447 = vmatpush1.xpose.msra.mxu0 0.0
    %448 = vmatprep.subr.mxu0 0.0
    %449 = vmatpush1.xpose.msra.mxu0 0.0
    %450 = vmatprep.subr.mxu0 0.0
    %451 = vmatpush1.xpose.msra.mxu0 0.0
    %452 = vmatprep.subr.mxu0 0.0
    %453 = vmatpush1.xpose.msra.mxu0 0.0
    %454 = vmatprep.subr.mxu0 0.0
    %455 = vmatpush1.xpose.msra.mxu0 0.0
    %456 = vmatprep.subr.mxu0 0.0
    %457 = vmatpush1.xpose.msra.mxu0 0.0
    %458 = vmatprep.subr.mxu0 0.0
    %459 = vmatpush1.xpose.msra.mxu0 0.0
    %460 = vmatprep.subr.mxu0 0.0
    %461 = vmatpush1.xpose.msra.mxu0 0.0
    %462 = vmatprep.subr.mxu0 0.0
    %463 = vmatpush1.xpose.msra.mxu0 0.0
    %464 = vmatprep.subr.mxu0 0.0
    %465 = vmatpush1.xpose.msra.mxu0 0.0
    %466 = vmatprep.subr.mxu0 0.0
    %467 = vmatpush1.xpose.msra.mxu0 0.0
    %468 = vmatprep.subr.mxu0 0.0
    %469 = vmatpush1.xpose.msra.mxu0 0.0
    %470 = vmatprep.subr.mxu0 0.0
    %471 = vmatpush1.xpose.msra.mxu0 0.0
    %472 = vmatprep.subr.mxu0 0.0
    %473 = vmatpush1.xpose.msra.mxu0 0.0
    %474 = vmatprep.subr.mxu0 0.0
    %475 = vmatpush1.xpose.msra.mxu0 0.0
    %476 = vmatprep.subr.mxu0 0.0
    %477 = vmatpush1.xpose.msra.mxu0 0.0
    %478 = vmatprep.subr.mxu0 0.0
    %479 = vmatpush1.xpose.msra.mxu0 0.0
    %480 = vmatprep.subr.mxu0 0.0
    %481 = vmatpush1.xpose.msra.mxu0 0.0
    %482 = vmatprep.subr.mxu0 0.0
    %483 = vmatpush1.xpose.msra.mxu0 0.0
    %484 = vmatprep.subr.mxu0 0.0
    %485 = vmatpush1.xpose.msra.mxu0 0.0
    %486 = vmatprep.subr.mxu0 0.0
    %487 = vmatpush1.xpose.msra.mxu0 0.0
    %488 = vmatprep.subr.mxu0 0.0
    %489 = vmatpush1.xpose.msra.mxu0 0.0
    %490 = vmatprep.subr.mxu0 0.0
    %491 = vmatpush1.xpose.msra.mxu0 0.0
    %492 = vmatprep.subr.mxu0 0.0
    %493 = vmatpush1.xpose.msra.mxu0 0.0
    %494 = vmatprep.subr.mxu0 0.0
    %495 = vmatpush1.xpose.msra.mxu0 0.0
    %496 = vmatprep.subr.mxu0 0.0
    %497 = vmatpush1.xpose.msra.mxu0 0.0
    %498 = vmatprep.subr.mxu0 0.0
    %499 = vmatpush1.xpose.msra.mxu0 0.0
    %500 = vmatprep.subr.mxu0 0.0
    %501 = vmatpush1.xpose.msra.mxu0 0.0
    %502 = vmatprep.mubr.f32.mxu0 %v117
    %503 = vmatmul.mubr.f32.gmra.mrb[0].mxu0 %v113
    %v504 = vpop.f32.mrb[0].mxu0
    %v505 = vadd.f32 %v435, %v504
    %v506 = vpop.f32.mrb[0].mxu0
    %507 = vdwg.mxu0
    %508 = vmatprep.subr.mxu0 %v54
    %509 = vmatpush1.xpose.msra.mxu0 %v53
    %510 = vmatprep.subr.mxu0 %v70
    %511 = vmatpush1.xpose.msra.mxu0 %v69
    %512 = vmatprep.subr.mxu0 0.0
    %513 = vmatpush1.xpose.msra.mxu0 0.0
    %514 = vmatprep.subr.mxu0 0.0
    %515 = vmatpush1.xpose.msra.mxu0 0.0
    %516 = vmatprep.subr.mxu0 0.0
    %517 = vmatpush1.xpose.msra.mxu0 0.0
    %518 = vmatprep.subr.mxu0 0.0
    %519 = vmatpush1.xpose.msra.mxu0 0.0
    %520 = vmatprep.subr.mxu0 0.0
    %521 = vmatpush1.xpose.msra.mxu0 0.0
    %522 = vmatprep.subr.mxu0 0.0
    %523 = vmatpush1.xpose.msra.mxu0 0.0
    %524 = vmatprep.subr.mxu0 0.0
    %525 = vmatpush1.xpose.msra.mxu0 0.0
    %526 = vmatprep.subr.mxu0 0.0
    %527 = vmatpush1.xpose.msra.mxu0 0.0
    %528 = vmatprep.subr.mxu0 0.0
    %529 = vmatpush1.xpose.msra.mxu0 0.0
    %530 = vmatprep.subr.mxu0 0.0
    %531 = vmatpush1.xpose.msra.mxu0 0.0
    %532 = vmatprep.subr.mxu0 0.0
    %533 = vmatpush1.xpose.msra.mxu0 0.0
    %534 = vmatprep.subr.mxu0 0.0
    %535 = vmatpush1.xpose.msra.mxu0 0.0
    %536 = vmatprep.subr.mxu0 0.0
    %537 = vmatpush1.xpose.msra.mxu0 0.0
    %538 = vmatprep.subr.mxu0 0.0
    %539 = vmatpush1.xpose.msra.mxu0 0.0
    %540 = vmatprep.subr.mxu0 0.0
    %541 = vmatpush1.xpose.msra.mxu0 0.0
    %542 = vmatprep.subr.mxu0 0.0
    %543 = vmatpush1.xpose.msra.mxu0 0.0
    %544 = vmatprep.subr.mxu0 0.0
    %545 = vmatpush1.xpose.msra.mxu0 0.0
    %546 = vmatprep.subr.mxu0 0.0
    %547 = vmatpush1.xpose.msra.mxu0 0.0
    %548 = vmatprep.subr.mxu0 0.0
    %549 = vmatpush1.xpose.msra.mxu0 0.0
    %550 = vmatprep.subr.mxu0 0.0
    %551 = vmatpush1.xpose.msra.mxu0 0.0
    %552 = vmatprep.subr.mxu0 0.0
    %553 = vmatpush1.xpose.msra.mxu0 0.0
    %554 = vmatprep.subr.mxu0 0.0
    %555 = vmatpush1.xpose.msra.mxu0 0.0
    %556 = vmatprep.subr.mxu0 0.0
    %557 = vmatpush1.xpose.msra.mxu0 0.0
    %558 = vmatprep.subr.mxu0 0.0
    %559 = vmatpush1.xpose.msra.mxu0 0.0
    %560 = vmatprep.subr.mxu0 0.0
    %561 = vmatpush1.xpose.msra.mxu0 0.0
    %562 = vmatprep.subr.mxu0 0.0
    %563 = vmatpush1.xpose.msra.mxu0 0.0
    %564 = vmatprep.subr.mxu0 0.0
    %565 = vmatpush1.xpose.msra.mxu0 0.0
    %566 = vmatprep.subr.mxu0 0.0
    %567 = vmatpush1.xpose.msra.mxu0 0.0
    %568 = vmatprep.subr.mxu0 0.0
    %569 = vmatpush1.xpose.msra.mxu0 0.0
    %570 = vmatprep.subr.mxu0 0.0
    %571 = vmatpush1.xpose.msra.mxu0 0.0
    %572 = vmatprep.mubr.f32.mxu0 %v125
    %573 = vmatmul.mubr.f32.gmra.mrb[0].mxu0 %v121
    %v574 = vpop.f32.mrb[0].mxu0
    %v575 = vadd.f32 %v505, %v574
    %v576 = vpop.f32.mrb[0].mxu0
    %577 = vdwg.mxu0
    %578 = vmatprep.subr.mxu0 %v56
    %579 = vmatpush1.xpose.msra.mxu0 %v55
    %580 = vmatprep.subr.mxu0 %v72
    %581 = vmatpush1.xpose.msra.mxu0 %v71
    %582 = vmatprep.subr.mxu0 0.0
    %583 = vmatpush1.xpose.msra.mxu0 0.0
    %584 = vmatprep.subr.mxu0 0.0
    %585 = vmatpush1.xpose.msra.mxu0 0.0
    %586 = vmatprep.subr.mxu0 0.0
    %587 = vmatpush1.xpose.msra.mxu0 0.0
    %588 = vmatprep.subr.mxu0 0.0
    %589 = vmatpush1.xpose.msra.mxu0 0.0
    %590 = vmatprep.subr.mxu0 0.0
    %591 = vmatpush1.xpose.msra.mxu0 0.0
    %592 = vmatprep.subr.mxu0 0.0
    %593 = vmatpush1.xpose.msra.mxu0 0.0
    %594 = vmatprep.subr.mxu0 0.0
    %595 = vmatpush1.xpose.msra.mxu0 0.0
    %596 = vmatprep.subr.mxu0 0.0
    %597 = vmatpush1.xpose.msra.mxu0 0.0
    %598 = vmatprep.subr.mxu0 0.0
    %599 = vmatpush1.xpose.msra.mxu0 0.0
    %600 = vmatprep.subr.mxu0 0.0
    %601 = vmatpush1.xpose.msra.mxu0 0.0
    %602 = vmatprep.subr.mxu0 0.0
    %603 = vmatpush1.xpose.msra.mxu0 0.0
    %604 = vmatprep.subr.mxu0 0.0
    %605 = vmatpush1.xpose.msra.mxu0 0.0
    %606 = vmatprep.subr.mxu0 0.0
    %607 = vmatpush1.xpose.msra.mxu0 0.0
    %608 = vmatprep.subr.mxu0 0.0
    %609 = vmatpush1.xpose.msra.mxu0 0.0
    %610 = vmatprep.subr.mxu0 0.0
    %611 = vmatpush1.xpose.msra.mxu0 0.0
    %612 = vmatprep.subr.mxu0 0.0
    %613 = vmatpush1.xpose.msra.mxu0 0.0
    %614 = vmatprep.subr.mxu0 0.0
    %615 = vmatpush1.xpose.msra.mxu0 0.0
    %616 = vmatprep.subr.mxu0 0.0
    %617 = vmatpush1.xpose.msra.mxu0 0.0
    %618 = vmatprep.subr.mxu0 0.0
    %619 = vmatpush1.xpose.msra.mxu0 0.0
    %620 = vmatprep.subr.mxu0 0.0
    %621 = vmatpush1.xpose.msra.mxu0 0.0
    %622 = vmatprep.subr.mxu0 0.0
    %623 = vmatpush1.xpose.msra.mxu0 0.0
    %624 = vmatprep.subr.mxu0 0.0
    %625 = vmatpush1.xpose.msra.mxu0 0.0
    %626 = vmatprep.subr.mxu0 0.0
    %627 = vmatpush1.xpose.msra.mxu0 0.0
    %628 = vmatprep.subr.mxu0 0.0
    %629 = vmatpush1.xpose.msra.mxu0 0.0
    %630 = vmatprep.subr.mxu0 0.0
    %631 = vmatpush1.xpose.msra.mxu0 0.0
    %632 = vmatprep.subr.mxu0 0.0
    %633 = vmatpush1.xpose.msra.mxu0 0.0
    %634 = vmatprep.subr.mxu0 0.0
    %635 = vmatpush1.xpose.msra.mxu0 0.0
    %636 = vmatprep.subr.mxu0 0.0
    %637 = vmatpush1.xpose.msra.mxu0 0.0
    %638 = vmatprep.subr.mxu0 0.0
    %639 = vmatpush1.xpose.msra.mxu0 0.0
    %640 = vmatprep.subr.mxu0 0.0
    %641 = vmatpush1.xpose.msra.mxu0 0.0
    %642 = vmatprep.mubr.f32.mxu0 %v133
    %643 = vmatmul.mubr.f32.gmra.mrb[0].mxu0 %v129
    %v644 = vpop.f32.mrb[0].mxu0
    %v645 = vadd.f32 %v575, %v644
    %v646 = vpop.f32.mrb[0].mxu0
    %647 = vdwg.mxu0
    %648 = vmatprep.subr.mxu0 %v58
    %649 = vmatpush1.xpose.msra.mxu0 %v57
    %650 = vmatprep.subr.mxu0 %v74
    %651 = vmatpush1.xpose.msra.mxu0 %v73
    %652 = vmatprep.subr.mxu0 0.0
    %653 = vmatpush1.xpose.msra.mxu0 0.0
    %654 = vmatprep.subr.mxu0 0.0
    %655 = vmatpush1.xpose.msra.mxu0 0.0
    %656 = vmatprep.subr.mxu0 0.0
    %657 = vmatpush1.xpose.msra.mxu0 0.0
    %658 = vmatprep.subr.mxu0 0.0
    %659 = vmatpush1.xpose.msra.mxu0 0.0
    %660 = vmatprep.subr.mxu0 0.0
    %661 = vmatpush1.xpose.msra.mxu0 0.0
    %662 = vmatprep.subr.mxu0 0.0
    %663 = vmatpush1.xpose.msra.mxu0 0.0
    %664 = vmatprep.subr.mxu0 0.0
    %665 = vmatpush1.xpose.msra.mxu0 0.0
    %666 = vmatprep.subr.mxu0 0.0
    %667 = vmatpush1.xpose.msra.mxu0 0.0
    %668 = vmatprep.subr.mxu0 0.0
    %669 = vmatpush1.xpose.msra.mxu0 0.0
    %670 = vmatprep.subr.mxu0 0.0
    %671 = vmatpush1.xpose.msra.mxu0 0.0
    %672 = vmatprep.subr.mxu0 0.0
    %673 = vmatpush1.xpose.msra.mxu0 0.0
    %674 = vmatprep.subr.mxu0 0.0
    %675 = vmatpush1.xpose.msra.mxu0 0.0
    %676 = vmatprep.subr.mxu0 0.0
    %677 = vmatpush1.xpose.msra.mxu0 0.0
    %678 = vmatprep.subr.mxu0 0.0
    %679 = vmatpush1.xpose.msra.mxu0 0.0
    %680 = vmatprep.subr.mxu0 0.0
    %681 = vmatpush1.xpose.msra.mxu0 0.0
    %682 = vmatprep.subr.mxu0 0.0
    %683 = vmatpush1.xpose.msra.mxu0 0.0
    %684 = vmatprep.subr.mxu0 0.0
    %685 = vmatpush1.xpose.msra.mxu0 0.0
    %686 = vmatprep.subr.mxu0 0.0
    %687 = vmatpush1.xpose.msra.mxu0 0.0
    %688 = vmatprep.subr.mxu0 0.0
    %689 = vmatpush1.xpose.msra.mxu0 0.0
    %690 = vmatprep.subr.mxu0 0.0
    %691 = vmatpush1.xpose.msra.mxu0 0.0
    %692 = vmatprep.subr.mxu0 0.0
    %693 = vmatpush1.xpose.msra.mxu0 0.0
    %694 = vmatprep.subr.mxu0 0.0
    %695 = vmatpush1.xpose.msra.mxu0 0.0
    %696 = vmatprep.subr.mxu0 0.0
    %697 = vmatpush1.xpose.msra.mxu0 0.0
    %698 = vmatprep.subr.mxu0 0.0
    %699 = vmatpush1.xpose.msra.mxu0 0.0
    %700 = vmatprep.subr.mxu0 0.0
    %701 = vmatpush1.xpose.msra.mxu0 0.0
    %702 = vmatprep.subr.mxu0 0.0
    %703 = vmatpush1.xpose.msra.mxu0 0.0
    %704 = vmatprep.subr.mxu0 0.0
    %705 = vmatpush1.xpose.msra.mxu0 0.0
    %706 = vmatprep.subr.mxu0 0.0
    %707 = vmatpush1.xpose.msra.mxu0 0.0
    %708 = vmatprep.subr.mxu0 0.0
    %709 = vmatpush1.xpose.msra.mxu0 0.0
    %710 = vmatprep.subr.mxu0 0.0
    %711 = vmatpush1.xpose.msra.mxu0 0.0
    %712 = vmatprep.mubr.f32.mxu0 %v141
    %713 = vmatmul.mubr.f32.gmra.mrb[0].mxu0 %v137
    %v714 = vpop.f32.mrb[0].mxu0
    %v715 = vadd.f32 %v645, %v714
    %v716 = vpop.f32.mrb[0].mxu0
    %717 = vdwg.mxu0
    %v718 = vxor.u32 %v715, 2147483648
    %v719 = vmul.f32 %v718, 1.442695
    %v720 = vpow.pop %v719
    %v721 = vadd.f32 %v720, 1.0
    %v722 = vrcp.pop %v721
    %v723 = vmul.f32 1.0, %v722
    %vm724 = vcmask 73728
    %725 = vst.msk [vmem:[#allocation7] sm:$0x1] %vm724, %v723
    // Predicated region
    $region22: #{tpu_custom_call.1} parent=1 // pred_check
      _
    $region23: #{tpu_custom_call.1} parent=1 // pred_check_branch
      %727 = sbr.rel (0) target = $region25
    $region24: #{tpu_custom_call.1} parent=1 // pred_region
      %s729 = ssub.s32 16, 16
      %730 = vsyncadd [#allocation4], %s729
      %s732 = sshll.u32 [#allocation7], 4
      %s733 = int_to_ptr.vmem [resolvable:$true] %s732
      %735 = dma.vmem_to_hbm [thread:$0]  %s733, 16, %s3, [#allocation4]
    $region25: #{tpu_custom_call.1} parent=1 // pred_fallthru
      _
    // Predicated region
    $region26: #{tpu_custom_call.1} parent=1 // pred_check
      _
    $region27: #{tpu_custom_call.1} parent=1 // pred_check_branch
      %737 = sbr.rel (0) target = $region29
    $region28: #{tpu_custom_call.1} parent=1 // pred_region
      %738 = dma.done [#allocation4], 16
    $region29: #{tpu_custom_call.1} parent=1 // pred_fallthru
      _
    %739 = vsyncpa [#allocation3], 1
    %740 = vsyncpa [#allocation6], 1
    %741 = vsyncpa [#allocation4], 1

</llo_original>
